<compile_context>
chip_gen: v5e
topology: v5e:2x2
jax: 0.10.0
libtpu: 0.0.40
codegen_flags: <defaults>
</compile_context>

<pallas_src>
import jax
import jax.numpy as jnp
from jax.experimental import pallas as pl
from jax.experimental.pallas import tpu as pltpu

_LANES = 128
_SUBLANES = 8


def _n3_kernel(x_ref, acc_ref):
    # acc_ref: (8, 128) f32 accumulator, resident across the inner (arbitrary)
    # grid axis; each parallel slice owns a distinct output block (no races).
    @pl.when(pl.program_id(1) == 0)
    def _():
        acc_ref[...] = jnp.zeros_like(acc_ref)

    x = x_ref[...].astype(jnp.float32)          # (block_rows, 128)
    a = jnp.abs(x)
    cube = a * a * a                            # |x|^3, pure VPU
    # Fold (block_rows, 128) -> (block_rows//8, 8, 128): the reduction over the
    # leading axis is vreg-wise VPU adds only (no cross-lane / XLU work).
    acc_ref[...] += jnp.sum(cube.reshape(-1, _SUBLANES, _LANES), axis=0)


def _n3_norm(factors, *, block_rows=8192, num_slices=2):
    """Returns sum_f sum(|f|**3) as a scalar f32, computed with one pallas_call."""
    flats = [jnp.ravel(f) for f in factors]
    n = sum(int(f.shape[0]) for f in flats)
    dtype = jnp.result_type(*[f.dtype for f in flats])

    # Lane-dense layout: pad total length up to rows * 128 with rows a multiple
    # of (num_slices * block_rows) so the grid divides evenly.
    rows = max(_SUBLANES, -(-n // _LANES))
    rows = -(-rows // _SUBLANES) * _SUBLANES
    block_rows = min(block_rows, rows)
    block_rows = -(-block_rows // _SUBLANES) * _SUBLANES
    chunk = num_slices * block_rows
    rows = -(-rows // chunk) * chunk
    padded = rows * _LANES

    parts = [f.astype(dtype) for f in flats]
    if padded > n:
        parts.append(jnp.zeros((padded - n,), dtype=dtype))
    x2 = jnp.concatenate(parts).reshape(rows, _LANES)

    inner = rows // chunk  # grid steps per parallel slice

    acc = pl.pallas_call(
        _n3_kernel,
        out_shape=jax.ShapeDtypeStruct((num_slices * _SUBLANES, _LANES), jnp.float32),
        grid_spec=pltpu.PrefetchScalarGridSpec(
            num_scalar_prefetch=0,
            grid=(num_slices, inner),
            in_specs=[
                pl.BlockSpec((block_rows, _LANES),
                             lambda p, i: (p * inner + i, 0)),
            ],
            out_specs=pl.BlockSpec((_SUBLANES, _LANES), lambda p, i: (p, 0)),
        ),
        compiler_params=pltpu.CompilerParams(
            dimension_semantics=("parallel", "arbitrary"),
            vmem_limit_bytes=32 * 1024 * 1024,
        ),
    )(x2)
    # Final cross-lane reduction of the small per-slice partial slabs in JAX.
    return jnp.sum(acc)


def n3(factors, weight):
    """N3 regularizer: sum_f weight * sum(|f|^3), divided by factors[0].shape[0].

    `weight` is constant across factors, so applying it once to the fused sum is
    exactly equivalent to the per-factor multiply in the PyTorch code.
    """
    total = _n3_norm(factors)
    return (weight * total) / factors[0].shape[0]


def _reference(factors, weight):
    norm = jnp.float32(0.0)
    for f in factors:
        norm = norm + weight * jnp.sum(jnp.abs(f.astype(jnp.float32)) ** 3)
    return norm / factors[0].shape[0]


if __name__ == "__main__":
    key = jax.random.PRNGKey(0)
    B, D = 8, 32
    weight = 0.01

    ks = jax.random.split(key, 3)
    # N3 is applied to a tuple of embedding factors, typically (lhs, rel, rhs),
    # each of shape (batch, rank).
    factors = tuple(jax.random.normal(k, (B, D), jnp.float32) for k in ks)

    out = n3(factors, weight)
    out = jax.block_until_ready(out)

    ref = _reference(factors, weight)
    assert jnp.allclose(out, ref, rtol=1e-5, atol=1e-5), (out, ref)
    print("KERNEL_OK")
</pallas_src>

<mosaic_0001>
module attributes {stable_mosaic.version = 11 : i64} {
  func.func @_n3_kernel(%arg0: i32, %arg1: i32, %arg2: memref<8x128xf32, #tpu.memory_space<vmem>>, %arg3: memref<8x128xf32, #tpu.memory_space<vmem>>) attributes {dimension_semantics = [#tpu.dimension_semantics<parallel>, #tpu.dimension_semantics<arbitrary>], iteration_bounds = array<i64: 2, 1>, scalar_prefetch = 0 : i64, scratch_operands = 0 : i64, tpu.core_type = #tpu.core_type<tc>, window_params = [{transform_indices = @transform_0, window_bounds = array<i64: 8, 128>}, {transform_indices = @transform_1, window_bounds = array<i64: 8, 128>}]} {
    %c0_i32 = arith.constant 0 : i32
    %0 = arith.cmpi eq, %arg1, %c0_i32 : i32
    %1 = arith.extui %0 : i1 to i32
    %c0_i32_0 = arith.constant 0 : i32
    %2 = arith.cmpi ne, %1, %c0_i32_0 : i32
    scf.if %2 {
      %cst_6 = arith.constant 0.000000e+00 : f32
      %12 = vector.broadcast %cst_6 : f32 to vector<8x128xf32>
      %c0_7 = arith.constant 0 : index
      %c0_8 = arith.constant 0 : index
      %13 = vector.load %arg3[%c0_7, %c0_8] : memref<8x128xf32, #tpu.memory_space<vmem>>, vector<8x128xf32>
      tpu.vector_store %arg3[%c0_7, %c0_8], %12 {strides = array<i32>} : memref<8x128xf32, #tpu.memory_space<vmem>>, vector<8x128xf32>,
    } else {
    }
    %c0 = arith.constant 0 : index
    %c0_1 = arith.constant 0 : index
    %3 = vector.load %arg2[%c0, %c0_1] : memref<8x128xf32, #tpu.memory_space<vmem>>, vector<8x128xf32>
    %4 = math.absf %3 : vector<8x128xf32>
    %5 = arith.mulf %4, %4 : vector<8x128xf32>
    %6 = arith.mulf %5, %4 : vector<8x128xf32>
    %c0_2 = arith.constant 0 : index
    %c0_3 = arith.constant 0 : index
    %7 = vector.load %arg3[%c0_2, %c0_3] : memref<8x128xf32, #tpu.memory_space<vmem>>, vector<8x128xf32>
    %8 = vector.shape_cast %6 : vector<8x128xf32> to vector<1x8x128xf32>
    %cst = arith.constant dense<0.000000e+00> : vector<8x128xf32>
    %9 = vector.multi_reduction <add>, %8, %cst [0] : vector<1x8x128xf32> to vector<8x128xf32>
    %10 = arith.addf %7, %9 : vector<8x128xf32>
    %c0_4 = arith.constant 0 : index
    %c0_5 = arith.constant 0 : index
    %11 = vector.load %arg3[%c0_4, %c0_5] : memref<8x128xf32, #tpu.memory_space<vmem>>, vector<8x128xf32>
    tpu.vector_store %arg3[%c0_4, %c0_5], %10 {strides = array<i32>} : memref<8x128xf32, #tpu.memory_space<vmem>>, vector<8x128xf32>,
    return
  }
  func.func @transform_0(%arg0: i32, %arg1: i32) -> (i32, i32) {
    %c1_i32 = arith.constant 1 : i32
    %0 = arith.muli %arg0, %c1_i32 : i32
    %1 = arith.addi %0, %arg1 : i32
    %c0_i32 = arith.constant 0 : i32
    %c0_i32_0 = arith.constant 0 : i32
    return %1, %c0_i32 : i32, i32
  }
  func.func @transform_1(%arg0: i32, %arg1: i32) -> (i32, i32) {
    %c0_i32 = arith.constant 0 : i32
    %c0_i32_0 = arith.constant 0 : i32
    return %arg0, %c0_i32 : i32, i32
  }
}

</mosaic_0001>

<llo_original>
// kernel: tpu_custom_call.1
$region0: #{tpu_custom_call.1}
  #allocation0 [shape = 'u32[]', space=smem, size = 0x4, offset = 0x4, fixed_abs, tag = 'smem constant byte address 0x4 - core index']
  #allocation1 [shape = 'u32[72,128]{1,0:T(1,128)}', space=vmem, size = 0x9000, scoped, tag = 'internal scratch']
  %s0 = inlined_call_operand.hbm [shape: f32[16,128], index: 0, kind: input, shape index: {}]
  %s1 = inlined_call_operand.hbm [shape: f32[16,128], index: 1, kind: output, shape index: {}]
  %s2 = sld [smem:[#allocation0]]
  $region45: #{tpu_custom_call.1} parent=0
    _
  %s4 = ssub.s32 1, %s2
  %s5 = scalar_select 0, %s4, %s2
  $region1: #{tpu_custom_call.1} parent=0
    #allocation2 [shape = 'u8[8192]{0}', space=vmem, size = 0x2000, scoped, tag = 'input window, operand 0']
    #allocation3 [shape = 's32[2]{0}', space=sflag, size = 0x8, scoped, tag = 'scoped memory for tpu_custom_call.1']
    #allocation4 [shape = 's32[2]{0}', space=sflag, size = 0x8, scoped, tag = 'scoped memory for tpu_custom_call.1']
    #allocation5 [shape = 'u8[8192]{0}', space=vmem, size = 0x2000, scoped, tag = 'output window, operand 0']
    %6 = vsyncpa [#allocation3], 0
    %s7 = scalar_lea.sflag [#allocation3], 1
    %8 = vsyncpa %s7, 0
    %9 = vsyncpa [#allocation4], 0
    %s10 = scalar_lea.sflag [#allocation4], 1
    %11 = vsyncpa %s10, 0
    loop: start=0, step=1, limit=4
    $region2: #{tpu_custom_call.1} parent=1 // loop_pre_header
      _
    $region3: #{tpu_custom_call.1} parent=1 // loop_header
      %s13 = sphi 0, %s17
      %p14 = scmp.ge.s32.totalorder %s13, 4
      %s20 = sphi 0, %s32
      %s21 = sphi 0, %s28
      %s22 = sphi 0, %s20
      %s23 = sphi 0, %s21
      %s24 = sphi 0, %s22
      %s25 = sphi 0, %s23
      %s37 = sphi 0, %s39
      %s40 = sphi 0, %s37
      %s41 = sphi 0, %s40
      %s57 = sphi 0, %s41
      %s63 = sphi 0, %s65
      %s66 = sphi 0, %s63
      %s67 = sphi 0, %s66
      %s83 = sphi 0, %s67
    $region4: #{tpu_custom_call.1} parent=1 // loop_header_branch
      %16 = sbr.rel (%p14) target = $region8
    $region5: #{tpu_custom_call.1} parent=1 // loop_body
      %s18 = ssub.s32 %s13, 1
      %s19 = ssub.s32 %s13, 2
      %s26 = sadd.s32 1, %s21
      %p27 = scmp.ge.s32.totalorder %s26, 1
      %s28 = scalar_select %p27, 0, %s26
      %s29 = sadd.s32 1, %s20
      %s30 = scalar_select %p27, %s29, %s20
      %p31 = scmp.ge.s32.totalorder %s30, 2
      %s32 = scalar_select %p31, 0, %s30
      %s33 = sadd.s32 %s20, %s21
      %s34 = sadd.s32 %s32, %s28
      %s35 = ssub.s32 %s33, %s34
      %p36 = scmp.eq.s32.totalorder %s35, 0
      %s38 = sadd.s32 %s37, 1
      %s39 = scalar_select %p36, %s37, %s38
      %p42 = pneg %p36
      %p43 = scmp.eq.s32.totalorder %s13, 1
      %p44 = por %p42, %p43
      %p45 = scmp.ne.s32.totalorder %s37, %s40
      %p46 = scmp.eq.s32.totalorder %s13, 0
      %p47 = por %p45, %p46
      %p48 = scmp.ne.s32.totalorder %s37, %s40
      %p49 = scmp.eq.s32.totalorder %s18, 1
      %p50 = por %p48, %p49
      %p51 = scmp.ne.s32.totalorder %s40, %s41
      %p52 = scmp.eq.s32.totalorder %s18, 0
      %p53 = por %p51, %p52
      %p54 = scmp.ne.s32.totalorder %s40, %s41
      %p55 = scmp.eq.s32.totalorder %s19, 1
      %p56 = por %p54, %p55
      %p58 = scmp.ne.s32.totalorder %s41, %s57
      %p59 = scmp.eq.s32.totalorder %s19, 0
      %p60 = por %p58, %p59
      %s61 = ssub.s32 %s20, %s32
      %p62 = scmp.eq.s32.totalorder %s61, 0
      %s64 = sadd.s32 %s63, 1
      %s65 = scalar_select %p62, %s63, %s64
      %p68 = pneg %p62
      %p69 = scmp.eq.s32.totalorder %s13, 1
      %p70 = por %p68, %p69
      %p71 = scmp.ne.s32.totalorder %s63, %s66
      %p72 = scmp.eq.s32.totalorder %s13, 0
      %p73 = por %p71, %p72
      %p74 = scmp.ne.s32.totalorder %s63, %s66
      %p75 = scmp.eq.s32.totalorder %s18, 1
      %p76 = por %p74, %p75
      %p77 = scmp.ne.s32.totalorder %s66, %s67
      %p78 = scmp.eq.s32.totalorder %s18, 0
      %p79 = por %p77, %p78
      %p80 = scmp.ne.s32.totalorder %s66, %s67
      %p81 = scmp.eq.s32.totalorder %s19, 1
      %p82 = por %p80, %p81
      %p84 = scmp.ne.s32.totalorder %s67, %s83
      %p85 = scmp.eq.s32.totalorder %s19, 0
      %p86 = por %p84, %p85
      %p87 = scmp.le.s32.totalorder 1, %s13
      %p88 = scmp.lt.s32.totalorder %s13, 3
      %p89 = pnand %p87, %p88
      %p90 = pneg %p89
      // Predicated region
      $region9: #{tpu_custom_call.1} parent=5 // pred_check
        _
      $region10: #{tpu_custom_call.1} parent=5 // pred_check_branch
        %92 = sbr.rel (%p89) target = $region12
      $region11: #{tpu_custom_call.1} parent=5 // pred_region
        %s93 = ssub.s32 %s13, 1
      $region12: #{tpu_custom_call.1} parent=5 // pred_fallthru
        _
      %p94 = scmp.lt.s32.totalorder %s13, 2
      // Predicated region
      $region13: #{tpu_custom_call.1} parent=5 // pred_check
        %p95 = pneg %p94
      $region14: #{tpu_custom_call.1} parent=5 // pred_check_branch
        %97 = sbr.rel (%p95) target = $region16
      $region15: #{tpu_custom_call.1} parent=5 // pred_region
        // Predicated region
        $region17: #{tpu_custom_call.1} parent=15 // pred_check
          %p98 = pneg %p47
        $region18: #{tpu_custom_call.1} parent=15 // pred_check_branch
          %100 = sbr.rel (%p98) target = $region20
        $region19: #{tpu_custom_call.1} parent=15 // pred_region
          %s101 = sand.u32 %s37, 1
          %s102 = scalar_lea.sflag [#allocation3], %s101
          %s103 = sand.u32 %s37, 1
          %s104 = smul.addr %s103, 8
          %s105 = scalar_lea.vmem [#allocation2], %s104
          %s106 = sadd.s32 %s20, %s21
          %108 = vsyncadd %s102, 0
          %s109 = smul.addr %s106, 8
          %s110 = scalar_lea.hbm %s0, %s109
          %s112 = sshll.u32 %s110, 4
          %s113 = int_to_ptr.hbm [resolvable:$true] %s112
          %s114 = sshll.u32 %s105, 4
          %s115 = int_to_ptr.vmem [resolvable:$true] %s114
          %117 = dma.hbm_to_vmem [thread:$0]  %s113, 128, %s115, %s102
        $region20: #{tpu_custom_call.1} parent=15 // pred_fallthru
          _
      $region16: #{tpu_custom_call.1} parent=5 // pred_fallthru
        _
      %p118 = scmp.le.s32.totalorder 1, %s13
      %p119 = scmp.lt.s32.totalorder %s13, 3
      %p120 = pnand %p118, %p119
      %p121 = pneg %p120
      // Predicated region
      $region21: #{tpu_custom_call.1} parent=5 // pred_check
        _
      $region22: #{tpu_custom_call.1} parent=5 // pred_check_branch
        %123 = sbr.rel (%p120) target = $region24
      $region23: #{tpu_custom_call.1} parent=5 // pred_region
        %s124 = ssub.s32 %s13, 1
        %s125 = sand.u32 %s40, 1
        %s126 = scalar_lea.sflag [#allocation3], %s125
        %s127 = sand.u32 %s40, 1
        %s128 = smul.addr %s127, 8
        %s129 = scalar_lea.vmem [#allocation2], %s128
        // Predicated region
        $region25: #{tpu_custom_call.1} parent=23 // pred_check
          %p130 = pneg %p53
        $region26: #{tpu_custom_call.1} parent=23 // pred_check_branch
          %132 = sbr.rel (%p130) target = $region28
        $region27: #{tpu_custom_call.1} parent=23 // pred_region
          %134 = dma.done %s126, 128
        $region28: #{tpu_custom_call.1} parent=23 // pred_fallthru
          _
        %s135 = sand.u32 %s40, 1
        %s136 = scalar_lea.sflag [#allocation3], %s135
        %s137 = sand.u32 %s40, 1
        %s138 = smul.addr %s137, 8
        %s139 = scalar_lea.vmem [#allocation2], %s138
        %p140 = pneg %p53
        %p141 = pneg %p50
        %p142 = pneg %p79
        %p143 = pneg %p76
        %s144 = sand.u32 %s66, 1
        %s145 = scalar_lea.sflag [#allocation4], %s144
        %s146 = sand.u32 %s66, 1
        %s147 = smul.addr %s146, 8
        %s148 = scalar_lea.vmem [#allocation5], %s147
        %s149 = sadd.s32 %s22, %s23
        %p150 = scmp.eq.s32.totalorder %s23, 0
        // Predicated region
        $region29: #{tpu_custom_call.1} parent=23 // pred_check
          %p151 = pneg %p150
        $region30: #{tpu_custom_call.1} parent=23 // pred_check_branch
          %153 = sbr.rel (%p151) target = $region32
        $region31: #{tpu_custom_call.1} parent=23 // pred_region
          %154 = vst [vmem:[%s148] sm:$0xff] 0.0
        $region32: #{tpu_custom_call.1} parent=23 // pred_fallthru
          _
        %v155 = vld [vmem:[%s129] sm:$0xff]
        %v156 = vand.u32 2147483647, %v155
        %v157 = vmul.f32 %v156, %v156
        %v158 = vmul.f32 %v157, %v156
        %v159 = vld [vmem:[%s148] sm:$0xff]
        %v160 = vadd.f32 %v158, 0.0
        %v161 = vadd.f32 %v159, %v160
        %162 = vst [vmem:[%s148] sm:$0xff] %v161
        %s163 = sand.u32 %s66, 1
        %s164 = scalar_lea.sflag [#allocation4], %s163
        %s165 = sand.u32 %s66, 1
        %s166 = smul.addr %s165, 8
        %s167 = scalar_lea.vmem [#allocation5], %s166
        // Predicated region
        $region33: #{tpu_custom_call.1} parent=23 // pred_check
          %p168 = pneg %p76
        $region34: #{tpu_custom_call.1} parent=23 // pred_check_branch
          %170 = sbr.rel (%p168) target = $region36
        $region35: #{tpu_custom_call.1} parent=23 // pred_region
          %172 = vsyncadd %s164, 0
          %s173 = smul.addr %s22, 8
          %s174 = scalar_lea.hbm %s1, %s173
          %s176 = sshll.u32 %s167, 4
          %s177 = int_to_ptr.vmem [resolvable:$true] %s176
          %s178 = sshll.u32 %s174, 4
          %s179 = int_to_ptr.hbm [resolvable:$true] %s178
          %181 = dma.vmem_to_hbm [thread:$0]  %s177, 128, %s179, %s164
        $region36: #{tpu_custom_call.1} parent=23 // pred_fallthru
          _
      $region24: #{tpu_custom_call.1} parent=5 // pred_fallthru
        _
      %p182 = scmp.le.s32.totalorder 2, %s13
      // Predicated region
      $region37: #{tpu_custom_call.1} parent=5 // pred_check
        %p183 = pneg %p182
      $region38: #{tpu_custom_call.1} parent=5 // pred_check_branch
        %185 = sbr.rel (%p183) target = $region40
      $region39: #{tpu_custom_call.1} parent=5 // pred_region
        %s186 = ssub.s32 %s13, 2
        // Predicated region
        $region41: #{tpu_custom_call.1} parent=39 // pred_check
          %p187 = pneg %p82
        $region42: #{tpu_custom_call.1} parent=39 // pred_check_branch
          %189 = sbr.rel (%p187) target = $region44
        $region43: #{tpu_custom_call.1} parent=39 // pred_region
          %s190 = sand.u32 %s67, 1
          %s191 = scalar_lea.sflag [#allocation4], %s190
          %s192 = sand.u32 %s67, 1
          %s193 = smul.addr %s192, 8
          %s194 = scalar_lea.vmem [#allocation5], %s193
          %196 = dma.done %s191, 128
        $region44: #{tpu_custom_call.1} parent=39 // pred_fallthru
          _
      $region40: #{tpu_custom_call.1} parent=5 // pred_fallthru
        _
    $region6: #{tpu_custom_call.1} parent=1 // loop_footer
      %s17 = sadd.s32 1, %s13
    $region7: #{tpu_custom_call.1} parent=1 // loop_footer_branch
      %12 = sbr.rel target = $region3
    $region8: #{tpu_custom_call.1} parent=1 // loop_exit
      _
    %197 = vsyncpa [#allocation3], 1
    %s198 = scalar_lea.sflag [#allocation3], 1
    %199 = vsyncpa %s198, 1
    %200 = vsyncpa [#allocation4], 1
    %s201 = scalar_lea.sflag [#allocation4], 1
    %202 = vsyncpa %s201, 1

</llo_original>
